<compile_context>
chip_gen: v7x
topology: tpu7x:2x2x1
jax: 0.10.0
libtpu: 0.0.40
codegen_flags: <defaults>
</compile_context>

<pallas_src>
import jax
import jax.numpy as jnp
from jax import lax
from jax.experimental import pallas as pl
from jax.experimental.pallas import tpu as pltpu

LANE = 128
SUBLANE = 8


def _round_up(x, m):
    return ((x + m - 1) // m) * m


def _pad_axis(x, axis, target):
    pad = target - x.shape[axis]
    if pad <= 0:
        return x
    cfg = [(0, 0)] * x.ndim
    cfg[axis] = (0, pad)
    return jnp.pad(x, cfg)


# ----------------------------------------------------------------------------
# One-time parameter preparation: hoist transposes, zero-pad to lane-dense
# shapes (padding is mathematically inert), and precompute the collapsed
# one-step transition A / c used by the fused rollout.
# ----------------------------------------------------------------------------
def prepare_closed_loop_params(K, bK, C, bC, negative=False):
    K = jnp.asarray(K, jnp.float32)
    bK = jnp.asarray(bK, jnp.float32)
    C = jnp.asarray(C, jnp.float32)
    bC = jnp.asarray(bC, jnp.float32)

    in_dim, out_dim = K.shape            # controller: Linear(out_dim -> in_dim)
    assert C.shape == (out_dim, in_dim)  # plant:      Linear(in_dim -> out_dim)
    in_p = _round_up(in_dim, LANE)
    out_p = _round_up(out_dim, LANE)

    kT = jnp.zeros((out_p, in_p), jnp.float32).at[:out_dim, :in_dim].set(K.T)
    cT = jnp.zeros((in_p, out_p), jnp.float32).at[:in_dim, :out_dim].set(C.T)
    bk = jnp.zeros((1, in_p), jnp.float32).at[0, :in_dim].set(bK)
    bc = jnp.zeros((1, out_p), jnp.float32).at[0, :out_dim].set(bC)

    sign = -1.0 if negative else 1.0     # run() applies the sign; forward() does not
    kT_run = sign * kT
    bk_run = sign * bk

    # Collapsed one-step transition:  y_{t+1} = y_t @ A + u_ext[t] @ C^T + c
    A = kT_run @ cT                      # (out_p, out_p)
    c = bk_run @ cT + bc                 # (1, out_p)

    return dict(kT=kT, bk=bk, cT=cT, bc=bc,
                kT_run=kT_run, bk_run=bk_run, A=A, c=c,
                in_dim=in_dim, out_dim=out_dim, in_p=in_p, out_p=out_p,
                negative=bool(negative))


# ----------------------------------------------------------------------------
# Single-step forward() kernel (grid-less; sublane/lane-dense padded tiles).
# ----------------------------------------------------------------------------
def _step_kernel(y_ref, uext_ref, kT_ref, bk_ref, cT_ref, bc_ref,
                 u_out_ref, y_out_ref):
    control_u = jnp.dot(y_ref[...], kT_ref[...],
                        preferred_element_type=jnp.float32) + bk_ref[...]
    u = control_u + uext_ref[...]
    u_out_ref[...] = u.astype(u_out_ref.dtype)
    y_next = jnp.dot(u, cT_ref[...],
                     preferred_element_type=jnp.float32) + bc_ref[...]
    y_out_ref[...] = y_next.astype(y_out_ref.dtype)


def closed_loop_forward(params, y, u_ext):
    """ClosedLoopSystem.forward (REN branch): (y, u_ext) -> (u, y_next)."""
    B = y.shape[0]
    in_dim, out_dim = params['in_dim'], params['out_dim']
    in_p, out_p = params['in_p'], params['out_p']
    bp = _round_up(B, SUBLANE)           # sublane-dense stores (perf review)

    y2 = _pad_axis(_pad_axis(y.reshape(B, out_dim).astype(jnp.float32), 1, out_p), 0, bp)
    u2 = _pad_axis(_pad_axis(u_ext.reshape(B, in_dim).astype(jnp.float32), 1, in_p), 0, bp)

    def full(shape):
        return pl.BlockSpec(shape, lambda: (0,) * len(shape))

    u_out, y_out = pl.pallas_call(
        _step_kernel,
        out_shape=(jax.ShapeDtypeStruct((bp, in_p), jnp.float32),
                   jax.ShapeDtypeStruct((bp, out_p), jnp.float32)),
        in_specs=[
            full((bp, out_p)),        # y
            full((bp, in_p)),         # u_ext
            full((out_p, in_p)),      # K^T
            full((1, in_p)),          # bK
            full((in_p, out_p)),      # C^T
            full((1, out_p)),         # bC
        ],
        out_specs=(full((bp, in_p)), full((bp, out_p))),
    )(y2, u2, params['kT'], params['bk'], params['cT'], params['bc'])

    return (u_out[:B, :in_dim].reshape(B, 1, in_dim).astype(y.dtype),
            y_out[:B, :out_dim].reshape(B, 1, out_dim).astype(y.dtype))


# ----------------------------------------------------------------------------
# Fused chunked rollout: run() (REN branch).  Per chunk of T_CHUNK steps:
#   v[t]     = u_ext[t] @ C^T              (one fat MXU matmul per chunk)
#   y_{t+1}  = y_t @ A + v[t] + c          (cheap serial fori_loop, state in VMEM)
#   u[t]     = +/-(y_t @ K^T + bK) + u_ext (one fat MXU matmul per chunk)
# Carried plant state lives in a VMEM scratch across grid iterations.
# ----------------------------------------------------------------------------
def _make_rollout_kernel(t_chunk, bp, in_p, out_p):
    def kernel(y0_ref, uext_ref, a_ref, c_ref, kT_ref, bk_ref, cT_ref,
               u_traj_ref, y_traj_ref, y_state, y_chunk, v_chunk):
        ci = pl.program_id(0)

        @pl.when(ci == 0)
        def _():
            y_state[...] = y0_ref[...]

        # Whole-chunk plant drive (M = t_chunk*bp rows on the MXU).
        ue = uext_ref[...]                                        # (tc, bp, in_p)
        v_flat = jnp.dot(ue.reshape(t_chunk * bp, in_p), cT_ref[...],
                         preferred_element_type=jnp.float32)
        v_chunk[...] = v_flat.reshape(t_chunk, bp, out_p)

        a = a_ref[...]
        c = c_ref[...]

        # Serial part of the recurrence (small, unavoidable).
        def body(t, y):
            y_chunk[t] = y                                        # record clean y_t
            return jnp.dot(y, a, preferred_element_type=jnp.float32) + v_chunk[t] + c

        y_final = lax.fori_loop(0, t_chunk, body, y_state[...], unroll=True)
        y_state[...] = y_final

        # Whole-chunk controller output, reconstructed from the stored Y slab.
        y_flat = y_chunk[...].reshape(t_chunk * bp, out_p)
        u_flat = jnp.dot(y_flat, kT_ref[...],
                         preferred_element_type=jnp.float32) + bk_ref[...]
        u_traj_ref[...] = (u_flat.reshape(t_chunk, bp, in_p) + ue).astype(u_traj_ref.dtype)
        y_traj_ref[...] = y_chunk[...].astype(y_traj_ref.dtype)

    return kernel


def closed_loop_run(params, y0, u_ext, output_noise_std=0.0, noise_key=None,
                    t_chunk=32):
    """Fused ClosedLoopSystem.run() (REN branch).

    y0:    (B, 1, out_dim) initial plant output
    u_ext: (B, T, in_dim)  external input trajectory
    returns (u_traj, y_traj): (B, T, in_dim), (B, T, out_dim)
    """
    B, T, in_dim = u_ext.shape
    out_dim = y0.shape[-1]
    assert in_dim == params['in_dim'] and out_dim == params['out_dim']
    in_p, out_p = params['in_p'], params['out_p']
    bp = _round_up(B, SUBLANE)

    tc = max(1, min(int(t_chunk), T))
    n_chunks = (T + tc - 1) // tc
    t_pad = n_chunks * tc

    y0p = _pad_axis(_pad_axis(y0.reshape(B, out_dim).astype(jnp.float32), 1, out_p), 0, bp)
    ue = jnp.transpose(u_ext.astype(jnp.float32), (1, 0, 2))            # (T, B, in)
    ue = _pad_axis(_pad_axis(_pad_axis(ue, 2, in_p), 1, bp), 0, t_pad)  # (t_pad, bp, in_p)

    kernel = _make_rollout_kernel(tc, bp, in_p, out_p)

    grid_spec = pltpu.PrefetchScalarGridSpec(
        num_scalar_prefetch=0,
        grid=(n_chunks,),
        in_specs=[
            pl.BlockSpec((bp, out_p), lambda ci: (0, 0)),          # y0      (resident)
            pl.BlockSpec((tc, bp, in_p), lambda ci: (ci, 0, 0)),   # u_ext chunk
            pl.BlockSpec((out_p, out_p), lambda ci: (0, 0)),       # A       (resident)
            pl.BlockSpec((1, out_p), lambda ci: (0, 0)),           # c       (resident)
            pl.BlockSpec((out_p, in_p), lambda ci: (0, 0)),        # +/-K^T  (resident)
            pl.BlockSpec((1, in_p), lambda ci: (0, 0)),            # +/-bK   (resident)
            pl.BlockSpec((in_p, out_p), lambda ci: (0, 0)),        # C^T     (resident)
        ],
        out_specs=(
            pl.BlockSpec((tc, bp, in_p), lambda ci: (ci, 0, 0)),   # u trajectory
            pl.BlockSpec((tc, bp, out_p), lambda ci: (ci, 0, 0)),  # y trajectory
        ),
        scratch_shapes=[
            pltpu.VMEM((bp, out_p), jnp.float32),                  # carried y state
            pltpu.VMEM((tc, bp, out_p), jnp.float32),              # chunk Y staging
            pltpu.VMEM((tc, bp, out_p), jnp.float32),              # chunk v staging
        ],
    )

    u_traj, y_traj = pl.pallas_call(
        kernel,
        out_shape=(jax.ShapeDtypeStruct((t_pad, bp, in_p), jnp.float32),
                   jax.ShapeDtypeStruct((t_pad, bp, out_p), jnp.float32)),
        grid_spec=grid_spec,
        compiler_params=pltpu.CompilerParams(
            dimension_semantics=("arbitrary",),        # time is a true recurrence
            vmem_limit_bytes=32 * 1024 * 1024,         # safe on v5e/v6e/v7x at these sizes
        ),
    )(y0p, ue, params['A'], params['c'], params['kT_run'], params['bk_run'],
      params['cT'])

    u_traj = jnp.transpose(u_traj[:T, :B, :in_dim], (1, 0, 2))     # (B, T, in_dim)
    y_traj = jnp.transpose(y_traj[:T, :B, :out_dim], (1, 0, 2))    # (B, T, out_dim)

    if output_noise_std and float(output_noise_std) > 0.0:
        # Noise never feeds back in the REN branch of run(); generate it with
        # exact randn semantics OFF the serial critical path (perf review).
        if noise_key is None:
            noise_key = jax.random.PRNGKey(0)
        y_traj = y_traj + float(output_noise_std) * jax.random.normal(
            noise_key, y_traj.shape, y_traj.dtype)

    return u_traj.astype(y0.dtype), y_traj.astype(y0.dtype)


if __name__ == "__main__":
    batch = 2
    output_dim = 16     # plant output dim (y)
    input_dim = 8       # plant input dim (u)
    horizon = 40

    key = jax.random.PRNGKey(0)
    k1, k2, k3, k4, k5, k6, k7 = jax.random.split(key, 7)

    # Deterministic synthetic parameters (linear controller + REN-style plant).
    K  = jax.random.normal(k1, (input_dim, output_dim), jnp.float32) * 0.1
    bK = jax.random.normal(k2, (input_dim,), jnp.float32) * 0.01
    C  = jax.random.normal(k3, (output_dim, input_dim), jnp.float32) * 0.1
    bC = jax.random.normal(k4, (output_dim,), jnp.float32) * 0.01

    y         = jax.random.normal(k5, (batch, 1, output_dim), jnp.float32)
    u_ext     = jax.random.normal(k6, (batch, 1, input_dim), jnp.float32)
    u_ext_tr  = jax.random.normal(k7, (batch, horizon, input_dim), jnp.float32)

    params = prepare_closed_loop_params(K, bK, C, bC, negative=False)

    # -------- single-step forward() --------
    u_p, y_p = closed_loop_forward(params, y, u_ext)
    jax.block_until_ready((u_p, y_p))

    control_u = y @ K.T + bK
    u_ref = control_u + u_ext
    y_ref = u_ref @ C.T + bC
    assert u_p.shape == (batch, 1, input_dim)
    assert y_p.shape == (batch, 1, output_dim)
    assert jnp.allclose(u_p, u_ref, atol=1e-5, rtol=1e-5)
    assert jnp.allclose(y_p, y_ref, atol=1e-5, rtol=1e-5)

    # -------- python-loop reference for run() --------
    def ref_run(negative):
        y_t = y.reshape(batch, output_dim)
        u_list, y_list = [], []
        for t in range(horizon):
            cu = y_t @ K.T + bK
            if negative:
                cu = -cu
            u_t = cu + u_ext_tr[:, t]
            y_list.append(y_t)
            u_list.append(u_t)
            y_t = u_t @ C.T + bC
        return jnp.stack(u_list, axis=1), jnp.stack(y_list, axis=1)

    # -------- fused chunked rollout, noise-free --------
    u_ref_traj, y_ref_traj = ref_run(False)
    u_traj, y_traj = closed_loop_run(params, y, u_ext_tr,
                                     output_noise_std=0.0, t_chunk=16)
    jax.block_until_ready((u_traj, y_traj))
    assert u_traj.shape == (batch, horizon, input_dim)
    assert y_traj.shape == (batch, horizon, output_dim)
    assert jnp.allclose(u_traj, u_ref_traj, atol=1e-4, rtol=1e-4)
    assert jnp.allclose(y_traj, y_ref_traj, atol=1e-4, rtol=1e-4)

    # -------- negative controller variant --------
    params_neg = prepare_closed_loop_params(K, bK, C, bC, negative=True)
    u_ref_neg, y_ref_neg = ref_run(True)
    u_tn, y_tn = closed_loop_run(params_neg, y, u_ext_tr,
                                 output_noise_std=0.0, t_chunk=16)
    jax.block_until_ready((u_tn, y_tn))
    assert jnp.allclose(u_tn, u_ref_neg, atol=1e-4, rtol=1e-4)
    assert jnp.allclose(y_tn, y_ref_neg, atol=1e-4, rtol=1e-4)

    # -------- rollout with output noise --------
    # In the REN branch the noise never feeds back into the state, so the
    # input trajectory must still match the noise-free reference exactly.
    u_n, y_n = closed_loop_run(params, y, u_ext_tr, output_noise_std=0.1,
                               noise_key=jax.random.PRNGKey(1234), t_chunk=16)
    jax.block_until_ready((u_n, y_n))
    assert u_n.shape == (batch, horizon, input_dim)
    assert y_n.shape == (batch, horizon, output_dim)
    assert jnp.allclose(u_n, u_ref_traj, atol=1e-4, rtol=1e-4)
    assert bool(jnp.all(jnp.isfinite(y_n)))

    print("KERNEL_OK")
</pallas_src>

<mosaic_0001>
module attributes {stable_mosaic.version = 11 : i64} {
  func.func @_step_kernel(%arg0: memref<8x128xf32, #tpu.memory_space<vmem>>, %arg1: memref<8x128xf32, #tpu.memory_space<vmem>>, %arg2: memref<128x128xf32, #tpu.memory_space<vmem>>, %arg3: memref<1x128xf32, #tpu.memory_space<vmem>>, %arg4: memref<128x128xf32, #tpu.memory_space<vmem>>, %arg5: memref<1x128xf32, #tpu.memory_space<vmem>>, %arg6: memref<8x128xf32, #tpu.memory_space<vmem>>, %arg7: memref<8x128xf32, #tpu.memory_space<vmem>>) attributes {dimension_semantics = [], scalar_prefetch = 0 : i64, scratch_operands = 0 : i64, tpu.core_type = #tpu.core_type<tc>} {
    %c0 = arith.constant 0 : index
    %c0_0 = arith.constant 0 : index
    %0 = vector.load %arg0[%c0, %c0_0] : memref<8x128xf32, #tpu.memory_space<vmem>>, vector<8x128xf32>
    %c0_1 = arith.constant 0 : index
    %c0_2 = arith.constant 0 : index
    %1 = vector.load %arg2[%c0_1, %c0_2] : memref<128x128xf32, #tpu.memory_space<vmem>>, vector<128x128xf32>
    %cst = arith.constant dense<0.000000e+00> : vector<8x128xf32>
    %2 = tpu.matmul %0, %1, %cst {dimension_numbers = #tpu.dot_dimension_numbers<[1], [0], [0], [1], [0, 0, 1, 1], [], []>} : vector<8x128xf32>, vector<128x128xf32>, vector<8x128xf32> -> vector<8x128xf32>
    %c0_3 = arith.constant 0 : index
    %c0_4 = arith.constant 0 : index
    %3 = vector.load %arg3[%c0_3, %c0_4] : memref<1x128xf32, #tpu.memory_space<vmem>>, vector<1x128xf32>
    %4 = vector.broadcast %3 : vector<1x128xf32> to vector<8x128xf32>
    %5 = arith.addf %2, %4 : vector<8x128xf32>
    %c0_5 = arith.constant 0 : index
    %c0_6 = arith.constant 0 : index
    %6 = vector.load %arg1[%c0_5, %c0_6] : memref<8x128xf32, #tpu.memory_space<vmem>>, vector<8x128xf32>
    %7 = arith.addf %5, %6 : vector<8x128xf32>
    %c0_7 = arith.constant 0 : index
    %c0_8 = arith.constant 0 : index
    %8 = vector.load %arg6[%c0_7, %c0_8] : memref<8x128xf32, #tpu.memory_space<vmem>>, vector<8x128xf32>
    tpu.vector_store %arg6[%c0_7, %c0_8], %7 {strides = array<i32>} : memref<8x128xf32, #tpu.memory_space<vmem>>, vector<8x128xf32>,
    %c0_9 = arith.constant 0 : index
    %c0_10 = arith.constant 0 : index
    %9 = vector.load %arg4[%c0_9, %c0_10] : memref<128x128xf32, #tpu.memory_space<vmem>>, vector<128x128xf32>
    %cst_11 = arith.constant dense<0.000000e+00> : vector<8x128xf32>
    %10 = tpu.matmul %7, %9, %cst_11 {dimension_numbers = #tpu.dot_dimension_numbers<[1], [0], [0], [1], [0, 0, 1, 1], [], []>} : vector<8x128xf32>, vector<128x128xf32>, vector<8x128xf32> -> vector<8x128xf32>
    %c0_12 = arith.constant 0 : index
    %c0_13 = arith.constant 0 : index
    %11 = vector.load %arg5[%c0_12, %c0_13] : memref<1x128xf32, #tpu.memory_space<vmem>>, vector<1x128xf32>
    %12 = vector.broadcast %11 : vector<1x128xf32> to vector<8x128xf32>
    %13 = arith.addf %10, %12 : vector<8x128xf32>
    %c0_14 = arith.constant 0 : index
    %c0_15 = arith.constant 0 : index
    %14 = vector.load %arg7[%c0_14, %c0_15] : memref<8x128xf32, #tpu.memory_space<vmem>>, vector<8x128xf32>
    tpu.vector_store %arg7[%c0_14, %c0_15], %13 {strides = array<i32>} : memref<8x128xf32, #tpu.memory_space<vmem>>, vector<8x128xf32>,
    return
  }
}

</mosaic_0001>

<llo_original>
// kernel: tpu_custom_call.1
$region0: #{tpu_custom_call.1}
  #allocation0 [shape = 'u32[]', space=smem, size = 0x4, offset = 0x4, fixed_abs, tag = 'smem constant byte address 0x4 - core index']
  #allocation1 [shape = 'u32[144,128]{1,0:T(1,128)}', space=vmem, size = 0x12000, scoped, tag = 'internal scratch']
  %s0 = inlined_call_operand.hbm [shape: f32[8,128], index: 0, kind: input, shape index: {}]
  %s1 = inlined_call_operand.hbm [shape: f32[8,128], index: 1, kind: input, shape index: {}]
  %s2 = inlined_call_operand.hbm [shape: f32[128,128], index: 2, kind: input, shape index: {}]
  %s3 = inlined_call_operand.vmem [shape: f32[1,128], index: 3, kind: input, shape index: {}]
  %s4 = inlined_call_operand.hbm [shape: f32[128,128], index: 4, kind: input, shape index: {}]
  %s5 = inlined_call_operand.vmem [shape: f32[1,128], index: 5, kind: input, shape index: {}]
  %s6 = inlined_call_operand.hbm [shape: f32[8,128], index: 6, kind: output, shape index: {0}]
  %s7 = inlined_call_operand.hbm [shape: f32[8,128], index: 7, kind: output, shape index: {1}]
  %8 = xla_tuple %s6, %s7
  %s9 = sld [smem:[#allocation0]]
  $region58: #{tpu_custom_call.1} parent=0
    _
  %s11 = ssub.s32 1, %s9
  %s12 = scalar_select 0, %s11, %s9
  $region1: #{tpu_custom_call.1} parent=0
    #allocation2 [shape = 'u8[4096]{0}', space=vmem, size = 0x1000, scoped, tag = 'input window, operand 0, single buffered']
    #allocation3 [shape = 's32[1]{0}', space=sflag, size = 0x4, scoped, tag = 'scoped memory for tpu_custom_call.1']
    #allocation4 [shape = 's32[1]{0}', space=sflag, size = 0x4, scoped, tag = 'scoped memory for tpu_custom_call.1']
    #allocation5 [shape = 'u8[4096]{0}', space=vmem, size = 0x1000, scoped, tag = 'input window, operand 1, single buffered']
    #allocation6 [shape = 's32[1]{0}', space=sflag, size = 0x4, scoped, tag = 'scoped memory for tpu_custom_call.1']
    #allocation7 [shape = 'u8[65536]{0}', space=vmem, size = 0x10000, scoped, tag = 'input window, operand 2, single buffered']
    #allocation8 [shape = 'u8[65536]{0}', space=vmem, size = 0x10000, scoped, tag = 'input window, operand 4, single buffered']
    #allocation9 [shape = 's32[1]{0}', space=sflag, size = 0x4, scoped, tag = 'scoped memory for tpu_custom_call.1']
    #allocation10 [shape = 'u8[4096]{0}', space=vmem, size = 0x1000, scoped, tag = 'output window, operand 0, single buffered']
    #allocation11 [shape = 'u8[4096]{0}', space=vmem, size = 0x1000, scoped, tag = 'output window, operand 1, single buffered']
    #allocation12 [shape = 's32[1]{0}', space=sflag, size = 0x4, scoped, tag = 'scoped memory for tpu_custom_call.1']
    %13 = vsyncpa [#allocation3], 0
    %14 = vsyncpa [#allocation6], 0
    %15 = vsyncpa [#allocation9], 0
    %16 = vsyncpa [#allocation4], 0
    %17 = vsyncpa [#allocation12], 0
    // Predicated region
    $region2: #{tpu_custom_call.1} parent=1 // pred_check
      _
    $region3: #{tpu_custom_call.1} parent=1 // pred_check_branch
      %19 = sbr.rel (0) target = $region5
    $region4: #{tpu_custom_call.1} parent=1 // pred_region
      %s21 = ssub.s32 128, 128
      %22 = vsyncadd [#allocation3], %s21
      %s24 = sshll.u32 [#allocation2], 4
      %s25 = int_to_ptr.vmem [resolvable:$true] %s24
      %27 = dma.hbm_to_vmem [thread:$0]  %s0, 128, %s25, [#allocation3]
    $region5: #{tpu_custom_call.1} parent=1 // pred_fallthru
      _
    // Predicated region
    $region6: #{tpu_custom_call.1} parent=1 // pred_check
      _
    $region7: #{tpu_custom_call.1} parent=1 // pred_check_branch
      %29 = sbr.rel (0) target = $region9
    $region8: #{tpu_custom_call.1} parent=1 // pred_region
      %s31 = ssub.s32 128, 128
      %32 = vsyncadd [#allocation6], %s31
      %s34 = sshll.u32 [#allocation5], 4
      %s35 = int_to_ptr.vmem [resolvable:$true] %s34
      %37 = dma.hbm_to_vmem [thread:$0]  %s1, 128, %s35, [#allocation6]
    $region9: #{tpu_custom_call.1} parent=1 // pred_fallthru
      _
    // Predicated region
    $region10: #{tpu_custom_call.1} parent=1 // pred_check
      _
    $region11: #{tpu_custom_call.1} parent=1 // pred_check_branch
      %39 = sbr.rel (0) target = $region13
    $region12: #{tpu_custom_call.1} parent=1 // pred_region
      %s41 = ssub.s32 2048, 2048
      %42 = vsyncadd [#allocation6], %s41
      %s43 = sshll.u32 [#allocation7], 4
      %s44 = int_to_ptr.vmem [resolvable:$true] %s43
      %49 = dma.hbm_to_vmem [thread:$0]  %s2, 2048, %s44, [#allocation6], 128, 128, 8
    $region13: #{tpu_custom_call.1} parent=1 // pred_fallthru
      _
    // Predicated region
    $region14: #{tpu_custom_call.1} parent=1 // pred_check
      _
    $region15: #{tpu_custom_call.1} parent=1 // pred_check_branch
      %51 = sbr.rel (0) target = $region17
    $region16: #{tpu_custom_call.1} parent=1 // pred_region
      _
    $region17: #{tpu_custom_call.1} parent=1 // pred_fallthru
      _
    // Predicated region
    $region18: #{tpu_custom_call.1} parent=1 // pred_check
      _
    $region19: #{tpu_custom_call.1} parent=1 // pred_check_branch
      %53 = sbr.rel (0) target = $region21
    $region20: #{tpu_custom_call.1} parent=1 // pred_region
      %s55 = ssub.s32 2048, 2048
      %56 = vsyncadd [#allocation9], %s55
      %s57 = sshll.u32 [#allocation8], 4
      %s58 = int_to_ptr.vmem [resolvable:$true] %s57
      %63 = dma.hbm_to_vmem [thread:$0]  %s4, 2048, %s58, [#allocation9], 128, 128, 8
    $region21: #{tpu_custom_call.1} parent=1 // pred_fallthru
      _
    // Predicated region
    $region22: #{tpu_custom_call.1} parent=1 // pred_check
      _
    $region23: #{tpu_custom_call.1} parent=1 // pred_check_branch
      %65 = sbr.rel (0) target = $region25
    $region24: #{tpu_custom_call.1} parent=1 // pred_region
      _
    $region25: #{tpu_custom_call.1} parent=1 // pred_fallthru
      _
    // Predicated region
    $region26: #{tpu_custom_call.1} parent=1 // pred_check
      _
    $region27: #{tpu_custom_call.1} parent=1 // pred_check_branch
      %67 = sbr.rel (0) target = $region29
    $region28: #{tpu_custom_call.1} parent=1 // pred_region
      %68 = dma.done [#allocation3], 128
    $region29: #{tpu_custom_call.1} parent=1 // pred_fallthru
      _
    // Predicated region
    $region30: #{tpu_custom_call.1} parent=1 // pred_check
      _
    $region31: #{tpu_custom_call.1} parent=1 // pred_check_branch
      %70 = sbr.rel (0) target = $region33
    $region32: #{tpu_custom_call.1} parent=1 // pred_region
      %71 = dma.done [#allocation6], 128
    $region33: #{tpu_custom_call.1} parent=1 // pred_fallthru
      _
    // Predicated region
    $region34: #{tpu_custom_call.1} parent=1 // pred_check
      _
    $region35: #{tpu_custom_call.1} parent=1 // pred_check_branch
      %73 = sbr.rel (0) target = $region37
    $region36: #{tpu_custom_call.1} parent=1 // pred_region
      %74 = dma.done [#allocation6], 2048
    $region37: #{tpu_custom_call.1} parent=1 // pred_fallthru
      _
    // Predicated region
    $region38: #{tpu_custom_call.1} parent=1 // pred_check
      _
    $region39: #{tpu_custom_call.1} parent=1 // pred_check_branch
      %76 = sbr.rel (0) target = $region41
    $region40: #{tpu_custom_call.1} parent=1 // pred_region
      %77 = dma.done [#allocation9], 2048
    $region41: #{tpu_custom_call.1} parent=1 // pred_fallthru
      _
    %v78 = vld [vmem:[#allocation2] sm:$0xff]
    %v79 = vld [vmem:[#allocation7] sm:$0xff]
    %v80 = vld [vmem:[#allocation7 + $0x8] sm:$0xff]
    %v81 = vld [vmem:[#allocation7 + $0x10] sm:$0xff]
    %v82 = vld [vmem:[#allocation7 + $0x18] sm:$0xff]
    %v83 = vld [vmem:[#allocation7 + $0x20] sm:$0xff]
    %v84 = vld [vmem:[#allocation7 + $0x28] sm:$0xff]
    %v85 = vld [vmem:[#allocation7 + $0x30] sm:$0xff]
    %v86 = vld [vmem:[#allocation7 + $0x38] sm:$0xff]
    %v87 = vld [vmem:[#allocation7 + $0x40] sm:$0xff]
    %v88 = vld [vmem:[#allocation7 + $0x48] sm:$0xff]
    %v89 = vld [vmem:[#allocation7 + $0x50] sm:$0xff]
    %v90 = vld [vmem:[#allocation7 + $0x58] sm:$0xff]
    %v91 = vld [vmem:[#allocation7 + $0x60] sm:$0xff]
    %v92 = vld [vmem:[#allocation7 + $0x68] sm:$0xff]
    %v93 = vld [vmem:[#allocation7 + $0x70] sm:$0xff]
    %v94 = vld [vmem:[#allocation7 + $0x78] sm:$0xff]
    %v95 = vld [vmem:[%s3] sm:$0x1]
    %v97 = vlaneseq
    %v98 = vshrl.u32 %v97, 7
    %v99 = vsub.s32 0, %v98
    %v100 = vrot.slane %v95, %v99
    %102 = vmatprep.subr.mxu0 0.0
    %103 = vmatpush1.msra.mxu0 %v79
    %104 = vmatprep.subr.mxu0 0.0
    %105 = vmatpush1.msra.mxu0 %v80
    %106 = vmatprep.subr.mxu0 0.0
    %107 = vmatpush1.msra.mxu0 %v81
    %108 = vmatprep.subr.mxu0 0.0
    %109 = vmatpush1.msra.mxu0 %v82
    %110 = vmatprep.subr.mxu0 0.0
    %111 = vmatpush1.msra.mxu0 %v83
    %112 = vmatprep.subr.mxu0 0.0
    %113 = vmatpush1.msra.mxu0 %v84
    %114 = vmatprep.subr.mxu0 0.0
    %115 = vmatpush1.msra.mxu0 %v85
    %116 = vmatprep.subr.mxu0 0.0
    %117 = vmatpush1.msra.mxu0 %v86
    %118 = vmatprep.subr.mxu0 0.0
    %119 = vmatpush1.msra.mxu0 %v87
    %120 = vmatprep.subr.mxu0 0.0
    %121 = vmatpush1.msra.mxu0 %v88
    %122 = vmatprep.subr.mxu0 0.0
    %123 = vmatpush1.msra.mxu0 %v89
    %124 = vmatprep.subr.mxu0 0.0
    %125 = vmatpush1.msra.mxu0 %v90
    %126 = vmatprep.subr.mxu0 0.0
    %127 = vmatpush1.msra.mxu0 %v91
    %128 = vmatprep.subr.mxu0 0.0
    %129 = vmatpush1.msra.mxu0 %v92
    %130 = vmatprep.subr.mxu0 0.0
    %131 = vmatpush1.msra.mxu0 %v93
    %132 = vmatprep.subr.mxu0 0.0
    %133 = vmatpush1.msra.mxu0 %v94
    %134 = vmatprep.subr.mxu0 0.0
    %135 = vmatpush1.msra.mxu0 0.0
    %136 = vmatprep.subr.mxu0 0.0
    %137 = vmatpush1.msra.mxu0 0.0
    %138 = vmatprep.subr.mxu0 0.0
    %139 = vmatpush1.msra.mxu0 0.0
    %140 = vmatprep.subr.mxu0 0.0
    %141 = vmatpush1.msra.mxu0 0.0
    %142 = vmatprep.subr.mxu0 0.0
    %143 = vmatpush1.msra.mxu0 0.0
    %144 = vmatprep.subr.mxu0 0.0
    %145 = vmatpush1.msra.mxu0 0.0
    %146 = vmatprep.subr.mxu0 0.0
    %147 = vmatpush1.msra.mxu0 0.0
    %148 = vmatprep.subr.mxu0 0.0
    %149 = vmatpush1.msra.mxu0 0.0
    %150 = vmatprep.subr.mxu0 0.0
    %151 = vmatpush1.msra.mxu0 0.0
    %152 = vmatprep.subr.mxu0 0.0
    %153 = vmatpush1.msra.mxu0 0.0
    %154 = vmatprep.subr.mxu0 0.0
    %155 = vmatpush1.msra.mxu0 0.0
    %156 = vmatprep.subr.mxu0 0.0
    %157 = vmatpush1.msra.mxu0 0.0
    %158 = vmatprep.subr.mxu0 0.0
    %159 = vmatpush1.msra.mxu0 0.0
    %160 = vmatprep.subr.mxu0 0.0
    %161 = vmatpush1.msra.mxu0 0.0
    %162 = vmatprep.subr.mxu0 0.0
    %163 = vmatpush1.msra.mxu0 0.0
    %164 = vmatprep.subr.mxu0 0.0
    %165 = vmatpush1.msra.mxu0 0.0
    %166 = vmatprep.mubr.f32.mxu0 0.0
    %167 = vmatmul.mubr.f32.gmra.mrb[0].mxu0 %v78
    %v168 = vpop.f32.mrb[0].mxu0
    %v169 = vadd.f32 %v100, %v168
    %v170 = vpop.f32.mrb[0].mxu0
    %171 = vdwg.mxu0
    %v172 = vld [vmem:[#allocation5] sm:$0xff]
    %v173 = vadd.f32 %v169, %v172
    %174 = vst [vmem:[#allocation10] sm:$0xff] %v173
    %v175 = vld [vmem:[#allocation8] sm:$0xff]
    %v176 = vld [vmem:[#allocation8 + $0x8] sm:$0xff]
    %v177 = vld [vmem:[#allocation8 + $0x10] sm:$0xff]
    %v178 = vld [vmem:[#allocation8 + $0x18] sm:$0xff]
    %v179 = vld [vmem:[#allocation8 + $0x20] sm:$0xff]
    %v180 = vld [vmem:[#allocation8 + $0x28] sm:$0xff]
    %v181 = vld [vmem:[#allocation8 + $0x30] sm:$0xff]
    %v182 = vld [vmem:[#allocation8 + $0x38] sm:$0xff]
    %v183 = vld [vmem:[#allocation8 + $0x40] sm:$0xff]
    %v184 = vld [vmem:[#allocation8 + $0x48] sm:$0xff]
    %v185 = vld [vmem:[#allocation8 + $0x50] sm:$0xff]
    %v186 = vld [vmem:[#allocation8 + $0x58] sm:$0xff]
    %v187 = vld [vmem:[#allocation8 + $0x60] sm:$0xff]
    %v188 = vld [vmem:[#allocation8 + $0x68] sm:$0xff]
    %v189 = vld [vmem:[#allocation8 + $0x70] sm:$0xff]
    %v190 = vld [vmem:[#allocation8 + $0x78] sm:$0xff]
    %v191 = vld [vmem:[%s5] sm:$0x1]
    %v193 = vlaneseq
    %v194 = vshrl.u32 %v193, 7
    %v195 = vsub.s32 0, %v194
    %v196 = vrot.slane %v191, %v195
    %198 = vmatprep.subr.mxu0 0.0
    %199 = vmatpush1.msra.mxu0 %v175
    %200 = vmatprep.subr.mxu0 0.0
    %201 = vmatpush1.msra.mxu0 %v176
    %202 = vmatprep.subr.mxu0 0.0
    %203 = vmatpush1.msra.mxu0 %v177
    %204 = vmatprep.subr.mxu0 0.0
    %205 = vmatpush1.msra.mxu0 %v178
    %206 = vmatprep.subr.mxu0 0.0
    %207 = vmatpush1.msra.mxu0 %v179
    %208 = vmatprep.subr.mxu0 0.0
    %209 = vmatpush1.msra.mxu0 %v180
    %210 = vmatprep.subr.mxu0 0.0
    %211 = vmatpush1.msra.mxu0 %v181
    %212 = vmatprep.subr.mxu0 0.0
    %213 = vmatpush1.msra.mxu0 %v182
    %214 = vmatprep.subr.mxu0 0.0
    %215 = vmatpush1.msra.mxu0 %v183
    %216 = vmatprep.subr.mxu0 0.0
    %217 = vmatpush1.msra.mxu0 %v184
    %218 = vmatprep.subr.mxu0 0.0
    %219 = vmatpush1.msra.mxu0 %v185
    %220 = vmatprep.subr.mxu0 0.0
    %221 = vmatpush1.msra.mxu0 %v186
    %222 = vmatprep.subr.mxu0 0.0
    %223 = vmatpush1.msra.mxu0 %v187
    %224 = vmatprep.subr.mxu0 0.0
    %225 = vmatpush1.msra.mxu0 %v188
    %226 = vmatprep.subr.mxu0 0.0
    %227 = vmatpush1.msra.mxu0 %v189
    %228 = vmatprep.subr.mxu0 0.0
    %229 = vmatpush1.msra.mxu0 %v190
    %230 = vmatprep.subr.mxu0 0.0
    %231 = vmatpush1.msra.mxu0 0.0
    %232 = vmatprep.subr.mxu0 0.0
    %233 = vmatpush1.msra.mxu0 0.0
    %234 = vmatprep.subr.mxu0 0.0
    %235 = vmatpush1.msra.mxu0 0.0
    %236 = vmatprep.subr.mxu0 0.0
    %237 = vmatpush1.msra.mxu0 0.0
    %238 = vmatprep.subr.mxu0 0.0
    %239 = vmatpush1.msra.mxu0 0.0
    %240 = vmatprep.subr.mxu0 0.0
    %241 = vmatpush1.msra.mxu0 0.0
    %242 = vmatprep.subr.mxu0 0.0
    %243 = vmatpush1.msra.mxu0 0.0
    %244 = vmatprep.subr.mxu0 0.0
    %245 = vmatpush1.msra.mxu0 0.0
    %246 = vmatprep.subr.mxu0 0.0
    %247 = vmatpush1.msra.mxu0 0.0
    %248 = vmatprep.subr.mxu0 0.0
    %249 = vmatpush1.msra.mxu0 0.0
    %250 = vmatprep.subr.mxu0 0.0
    %251 = vmatpush1.msra.mxu0 0.0
    %252 = vmatprep.subr.mxu0 0.0
    %253 = vmatpush1.msra.mxu0 0.0
    %254 = vmatprep.subr.mxu0 0.0
    %255 = vmatpush1.msra.mxu0 0.0
    %256 = vmatprep.subr.mxu0 0.0
    %257 = vmatpush1.msra.mxu0 0.0
    %258 = vmatprep.subr.mxu0 0.0
    %259 = vmatpush1.msra.mxu0 0.0
    %260 = vmatprep.subr.mxu0 0.0
    %261 = vmatpush1.msra.mxu0 0.0
    %262 = vmatprep.mubr.f32.mxu0 0.0
    %263 = vmatmul.mubr.f32.gmra.mrb[0].mxu0 %v173
    %v264 = vpop.f32.mrb[0].mxu0
    %v265 = vadd.f32 %v196, %v264
    %v266 = vpop.f32.mrb[0].mxu0
    %267 = vdwg.mxu0
    %268 = vst [vmem:[#allocation11] sm:$0xff] %v265
    // Predicated region
    $region42: #{tpu_custom_call.1} parent=1 // pred_check
      _
    $region43: #{tpu_custom_call.1} parent=1 // pred_check_branch
      %270 = sbr.rel (0) target = $region45
    $region44: #{tpu_custom_call.1} parent=1 // pred_region
      %s272 = ssub.s32 128, 128
      %273 = vsyncadd [#allocation4], %s272
      %s275 = sshll.u32 [#allocation10], 4
      %s276 = int_to_ptr.vmem [resolvable:$true] %s275
      %278 = dma.vmem_to_hbm [thread:$0]  %s276, 128, %s6, [#allocation4]
    $region45: #{tpu_custom_call.1} parent=1 // pred_fallthru
      _
    // Predicated region
    $region46: #{tpu_custom_call.1} parent=1 // pred_check
      _
    $region47: #{tpu_custom_call.1} parent=1 // pred_check_branch
      %280 = sbr.rel (0) target = $region49
    $region48: #{tpu_custom_call.1} parent=1 // pred_region
      %s282 = ssub.s32 128, 128
      %283 = vsyncadd [#allocation12], %s282
      %s285 = sshll.u32 [#allocation11], 4
      %s286 = int_to_ptr.vmem [resolvable:$true] %s285
      %288 = dma.vmem_to_hbm [thread:$0]  %s286, 128, %s7, [#allocation12]
    $region49: #{tpu_custom_call.1} parent=1 // pred_fallthru
      _
    // Predicated region
    $region50: #{tpu_custom_call.1} parent=1 // pred_check
      _
    $region51: #{tpu_custom_call.1} parent=1 // pred_check_branch
      %290 = sbr.rel (0) target = $region53
    $region52: #{tpu_custom_call.1} parent=1 // pred_region
      %291 = dma.done [#allocation4], 128
    $region53: #{tpu_custom_call.1} parent=1 // pred_fallthru
      _
    // Predicated region
    $region54: #{tpu_custom_call.1} parent=1 // pred_check
      _
    $region55: #{tpu_custom_call.1} parent=1 // pred_check_branch
      %293 = sbr.rel (0) target = $region57
    $region56: #{tpu_custom_call.1} parent=1 // pred_region
      %294 = dma.done [#allocation12], 128
    $region57: #{tpu_custom_call.1} parent=1 // pred_fallthru
      _
    %295 = vsyncpa [#allocation3], 1
    %296 = vsyncpa [#allocation6], 1
    %297 = vsyncpa [#allocation9], 1
    %298 = vsyncpa [#allocation4], 1
    %299 = vsyncpa [#allocation12], 1

</llo_original>
